<compile_context>
chip_gen: v7x
topology: tpu7x:2x2x1
jax: 0.10.0
libtpu: 0.0.40
codegen_flags: <defaults>
</compile_context>

<pallas_src>
import functools
import math

import numpy as np
import jax
import jax.numpy as jnp
from jax.experimental import pallas as pl
from jax.experimental.pallas import tpu as pltpu


def _build_pe_table(d_model: int, seq_len: int) -> np.ndarray:
    """Vectorized reproduction of the PyTorch __init__ double loop.

    NOTE: this matches the module exactly, including its quirky cos exponent
    2*(i+1)/d_model (NOT the textbook sinusoidal PE formula).
    """
    assert d_model % 2 == 0, "module writes pe[pos, i+1]; d_model must be even"
    pos = np.arange(seq_len, dtype=np.float64)[:, None]            # [S, 1]
    i_even = np.arange(0, d_model, 2, dtype=np.float64)[None, :]   # [1, D/2] = 0,2,4,...
    pe = np.zeros((seq_len, d_model), dtype=np.float32)
    pe[:, 0::2] = np.sin(pos / 10000.0 ** (2.0 * i_even / d_model))
    pe[:, 1::2] = np.cos(pos / 10000.0 ** (2.0 * (i_even + 1.0) / d_model))
    return pe[None, :, :]                                          # [1, seq_len, d_model]


def _pos_enc_kernel(x_ref, pe_ref, o_ref, *, scale):
    # Fused elementwise hot path: out = scale * x + pe.
    o_ref[...] = (scale * x_ref[...] + pe_ref[...]).astype(o_ref.dtype)


def _largest_lane(flat: int, cap: int = 2048):
    """Largest multiple of 128 that divides `flat` (capped), else None."""
    if flat % 128 != 0:
        return None
    m = flat // 128
    for d in range(min(m, cap // 128), 0, -1):
        if m % d == 0:
            return 128 * d
    return 128


def _block_target_and_vmem_cap():
    """Generation-aware tile target / scoped-VMEM cap.

    v5e/v6e have 128 MiB physical VMEM per TensorCore -> larger (6 MiB) tiles;
    v7x has only 64 MiB/TC (or if the query fails) -> 4 MiB tiles and a cap
    that keeps the double buffers well under ~48 MiB.
    """
    try:
        phys = int(pltpu.get_tpu_info().vmem_capacity_bytes)
    except Exception:  # pragma: no cover - conservative fallback
        phys = 0
    if phys >= 100 * 1024 * 1024:          # v5e / v6e
        return 6 * 1024 * 1024, 56 * 1024 * 1024
    return 4 * 1024 * 1024, 40 * 1024 * 1024   # v7x or unknown


def _pick_tile_r(n_rows: int, rows_cap: int, sub: int) -> int:
    """Largest sublane-aligned tile <= rows_cap, preferring divisors of n_rows."""
    d = max(sub, (rows_cap // sub) * sub)
    cand = d
    while cand >= sub:
        if n_rows % cand == 0:
            return cand
        cand -= sub
    return d  # ragged edge fallback (Pallas masks the partial last block)


def positional_encoding(x: jax.Array, pe: jax.Array, d_model: int) -> jax.Array:
    """x: [B, S, D], pe: [1, seq_len, D] with seq_len >= S."""
    B, S, D = x.shape
    assert pe.ndim == 3 and pe.shape[0] == 1 and pe.shape[2] == D, "pe must be [1, seq_len, D]"
    assert pe.shape[1] >= S, f"pe seq_len ({pe.shape[1]}) shorter than input sequence ({S})"

    scale = math.sqrt(d_model)
    out_dtype = jnp.result_type(x.dtype, pe.dtype)   # matches torch type promotion

    # Only materialize the sequence slice when it is actually a slice.
    pe_s = pe if pe.shape[1] == S else pe[:, :S, :]
    # TODO(synk): for seq_len > S the slice could be folded into the index_map
    # (needs lane | D); kept as a wrapper slice for generality.

    # ---- lane-dense re-layout: last dim a multiple of 128 ----
    lane = _largest_lane(S * D)
    pad_d = 0
    D_eff = D
    if lane is None:
        # No 128-multiple divides S*D: pad D to a multiple of 128 so stores
        # stay unmasked; slice the pad off the output afterwards.
        D_eff = ((D + 127) // 128) * 128
        pad_d = D_eff - D
        x = jnp.pad(x, ((0, 0), (0, 0), (0, pad_d)))
        pe_s = jnp.pad(pe_s, ((0, 0), (0, 0), (0, pad_d)))
        lane = _largest_lane(S * D_eff)

    F = S * D_eff
    n_rows = F // lane

    x2 = x.reshape(B, n_rows, lane)
    pe2 = pe_s.reshape(1, n_rows, lane)

    # ---- row tiling ----
    x_item = int(jnp.dtype(x.dtype).itemsize)
    pe_item = int(jnp.dtype(pe.dtype).itemsize)
    out_item = int(jnp.dtype(out_dtype).itemsize)
    max_item = max(x_item, pe_item, out_item)

    # dtype-aware sublane packing: 8 rows (32-bit), 16 (16-bit), 32 (8-bit)
    sub = 8 * max(1, 4 // max(1, min(x_item, out_item)))

    target_bytes, vmem_cap = _block_target_and_vmem_cap()
    rows_per_block = max(1, target_bytes // (lane * max_item))

    if n_rows <= rows_per_block:
        tile_r = n_rows                      # whole row axis in one block (full-dim => legal)
    else:
        tile_r = _pick_tile_r(n_rows, rows_per_block, sub)

    n_r_blocks = pl.cdiv(n_rows, tile_r)

    # v7x: make sure both TensorCores get work when B == 1 and work is non-trivial.
    total_bytes = B * n_rows * lane * max_item
    if B * n_r_blocks < 2 and n_rows >= 2 * sub and total_bytes > 512 * 1024:
        tile_r = max(sub, ((n_rows // 2) // sub) * sub)
        n_r_blocks = pl.cdiv(n_rows, tile_r)

    grid = (n_r_blocks, B)   # batch innermost: pe block index constant across batch

    # pe spec: resident (constant index_map) when a single row block covers it.
    pe_whole = (tile_r == n_rows)
    if pe_whole:
        pe_spec = pl.BlockSpec((1, n_rows, lane), lambda r, b: (0, 0, 0))
        pe_blk_bytes = n_rows * lane * pe_item
    else:
        pe_spec = pl.BlockSpec((1, tile_r, lane), lambda r, b: (0, r, 0))
        pe_blk_bytes = tile_r * lane * pe_item

    # Raise scoped VMEM just enough for the (double-buffered) blocks,
    # capped safely under v7x's 64 MiB/TC physical VMEM.
    x_blk_bytes = tile_r * lane * x_item
    o_blk_bytes = tile_r * lane * out_item
    vmem_need = 2 * (x_blk_bytes + o_blk_bytes + pe_blk_bytes)
    vmem_limit = min(vmem_cap, max(32 * 1024 * 1024, vmem_need + 8 * 1024 * 1024))

    kernel = functools.partial(_pos_enc_kernel, scale=scale)

    out2 = pl.pallas_call(
        kernel,
        out_shape=jax.ShapeDtypeStruct((B, n_rows, lane), out_dtype),
        grid_spec=pl.GridSpec(
            grid=grid,
            in_specs=[
                pl.BlockSpec((1, tile_r, lane), lambda r, b: (b, r, 0)),   # x tile
                pe_spec,                                                   # shared pe tile
            ],
            out_specs=pl.BlockSpec((1, tile_r, lane), lambda r, b: (b, r, 0)),
        ),
        compiler_params=pltpu.CompilerParams(
            dimension_semantics=("parallel", "parallel"),
            vmem_limit_bytes=int(vmem_limit),
        ),
        cost_estimate=pl.CostEstimate(
            flops=2 * B * F,
            transcendentals=0,
            bytes_accessed=B * F * (x_item + out_item) + n_rows * lane * pe_item,
        ),
    )(x2, pe2)

    out = out2.reshape(B, S, D_eff)
    if pad_d:
        out = out[:, :, :D]
    return out


if __name__ == "__main__":
    # Small shapes consistent with the module: batch=2, seq=8, d_model=32
    d_model = 32
    seq_len = 8
    batch = 2

    pe_np = _build_pe_table(d_model, seq_len)            # deterministic "buffer"
    pe = jnp.asarray(pe_np, dtype=jnp.float32)

    key = jax.random.PRNGKey(0)
    x = jax.random.normal(key, (batch, seq_len, d_model), dtype=jnp.float32)

    out = positional_encoding(x, pe, d_model)
    out = jax.block_until_ready(out)

    # Pure-JAX reference check
    ref = math.sqrt(d_model) * x + pe[:, :seq_len, :]
    np.testing.assert_allclose(np.asarray(out), np.asarray(ref), rtol=1e-6, atol=1e-6)

    print("KERNEL_OK")
</pallas_src>

<mosaic_0001>
module attributes {stable_mosaic.version = 11 : i64} {
  func.func @_pos_enc_kernel(%arg0: i32, %arg1: i32, %arg2: memref<1x1x256xf32, #tpu.memory_space<vmem>>, %arg3: memref<1x1x256xf32, #tpu.memory_space<vmem>>, %arg4: memref<1x1x256xf32, #tpu.memory_space<vmem>>) attributes {dimension_semantics = [#tpu.dimension_semantics<parallel>, #tpu.dimension_semantics<parallel>], iteration_bounds = array<i64: 1, 2>, scalar_prefetch = 0 : i64, scratch_operands = 0 : i64, tpu.core_type = #tpu.core_type<tc>, window_params = [{transform_indices = @transform_0, window_bounds = array<i64: 1, 1, 256>}, {pipeline_mode = #tpu.pipeline_mode<synchronous>, transform_indices = @transform_1, window_bounds = array<i64: 1, 1, 256>}, {transform_indices = @transform_2, window_bounds = array<i64: 1, 1, 256>}]} {
    %c0 = arith.constant 0 : index
    %c0_0 = arith.constant 0 : index
    %c0_1 = arith.constant 0 : index
    %0 = vector.load %arg2[%c0, %c0_0, %c0_1] : memref<1x1x256xf32, #tpu.memory_space<vmem>>, vector<1x1x256xf32>
    %cst = arith.constant 5.65685415 : f32
    %1 = vector.broadcast %cst : f32 to vector<1x1x256xf32>
    %2 = arith.mulf %1, %0 : vector<1x1x256xf32>
    %c0_2 = arith.constant 0 : index
    %c0_3 = arith.constant 0 : index
    %c0_4 = arith.constant 0 : index
    %3 = vector.load %arg3[%c0_2, %c0_3, %c0_4] : memref<1x1x256xf32, #tpu.memory_space<vmem>>, vector<1x1x256xf32>
    %4 = arith.addf %2, %3 : vector<1x1x256xf32>
    %c0_5 = arith.constant 0 : index
    %c0_6 = arith.constant 0 : index
    %c0_7 = arith.constant 0 : index
    %5 = vector.load %arg4[%c0_5, %c0_6, %c0_7] : memref<1x1x256xf32, #tpu.memory_space<vmem>>, vector<1x1x256xf32>
    tpu.vector_store %arg4[%c0_5, %c0_6, %c0_7], %4 {strides = array<i32>} : memref<1x1x256xf32, #tpu.memory_space<vmem>>, vector<1x1x256xf32>,
    return
  }
  func.func @transform_0(%arg0: i32, %arg1: i32) -> (i32, i32, i32) {
    %c0_i32 = arith.constant 0 : i32
    %c0_i32_0 = arith.constant 0 : i32
    return %arg1, %arg0, %c0_i32 : i32, i32, i32
  }
  func.func @transform_1(%arg0: i32, %arg1: i32) -> (i32, i32, i32) {
    %c0_i32 = arith.constant 0 : i32
    %c0_i32_0 = arith.constant 0 : i32
    %c0_i32_1 = arith.constant 0 : i32
    %c0_i32_2 = arith.constant 0 : i32
    return %c0_i32, %c0_i32_0, %c0_i32_1 : i32, i32, i32
  }
  func.func @transform_2(%arg0: i32, %arg1: i32) -> (i32, i32, i32) {
    %c0_i32 = arith.constant 0 : i32
    %c0_i32_0 = arith.constant 0 : i32
    return %arg1, %arg0, %c0_i32 : i32, i32, i32
  }
}

</mosaic_0001>

<llo_original>
// kernel: tpu_custom_call.1
$region0: #{tpu_custom_call.1}
  #allocation0 [shape = 'u32[]', space=smem, size = 0x4, offset = 0x4, fixed_abs, tag = 'smem constant byte address 0x4 - core index']
  #allocation1 [shape = 'u32[144,128]{1,0:T(1,128)}', space=vmem, size = 0x12000, scoped, tag = 'internal scratch']
  %s0 = inlined_call_operand.hbm [shape: f32[2,1,256], index: 0, kind: input, shape index: {}]
  %s1 = inlined_call_operand.vmem [shape: f32[1,1,256], index: 1, kind: input, shape index: {}]
  %s2 = inlined_call_operand.hbm [shape: f32[2,1,256], index: 2, kind: output, shape index: {}]
  %s3 = sld [smem:[#allocation0]]
  $region45: #{tpu_custom_call.1} parent=0
    _
  %s5 = ssub.s32 1, %s3
  %s6 = scalar_select 0, %s5, %s3
  $region1: #{tpu_custom_call.1} parent=0
    #allocation2 [shape = 'u8[2048]{0}', space=vmem, size = 0x800, scoped, tag = 'input window, operand 0']
    #allocation3 [shape = 's32[2]{0}', space=sflag, size = 0x8, scoped, tag = 'scoped memory for tpu_custom_call.1']
    #allocation4 [shape = 's32[2]{0}', space=sflag, size = 0x8, scoped, tag = 'scoped memory for tpu_custom_call.1']
    #allocation5 [shape = 'u8[2048]{0}', space=vmem, size = 0x800, scoped, tag = 'output window, operand 0']
    %7 = vsyncpa [#allocation3], 0
    %s8 = scalar_lea.sflag [#allocation3], 1
    %9 = vsyncpa %s8, 0
    %10 = vsyncpa [#allocation4], 0
    %s11 = scalar_lea.sflag [#allocation4], 1
    %12 = vsyncpa %s11, 0
    loop: start=0, step=1, limit=4
    $region2: #{tpu_custom_call.1} parent=1 // loop_pre_header
      _
    $region3: #{tpu_custom_call.1} parent=1 // loop_header
      %s14 = sphi 0, %s18
      %p15 = scmp.ge.s32.totalorder %s14, 4
      %s21 = sphi 0, %s33
      %s22 = sphi 0, %s29
      %s23 = sphi 0, %s21
      %s24 = sphi 0, %s22
      %s25 = sphi 0, %s23
      %s26 = sphi 0, %s24
      %s38 = sphi 0, %s40
      %s41 = sphi 0, %s38
      %s42 = sphi 0, %s41
      %s58 = sphi 0, %s42
      %s62 = sphi 0, %s62
      %s64 = sphi 0, %s62
      %s65 = sphi 0, %s64
      %s79 = sphi 0, %s65
      %s87 = sphi 0, %s89
      %s90 = sphi 0, %s87
      %s91 = sphi 0, %s90
      %s107 = sphi 0, %s91
    $region4: #{tpu_custom_call.1} parent=1 // loop_header_branch
      %17 = sbr.rel (%p15) target = $region8
    $region5: #{tpu_custom_call.1} parent=1 // loop_body
      %s19 = ssub.s32 %s14, 1
      %s20 = ssub.s32 %s14, 2
      %s27 = sadd.s32 1, %s22
      %p28 = scmp.ge.s32.totalorder %s27, 2
      %s29 = scalar_select %p28, 0, %s27
      %s30 = sadd.s32 1, %s21
      %s31 = scalar_select %p28, %s30, %s21
      %p32 = scmp.ge.s32.totalorder %s31, 1
      %s33 = scalar_select %p32, 0, %s31
      %s34 = ssub.s32 %s22, %s29
      %s35 = ssub.s32 %s21, %s33
      %s36 = sor.u32 %s34, %s35
      %p37 = scmp.eq.s32.totalorder %s36, 0
      %s39 = sadd.s32 %s38, 1
      %s40 = scalar_select %p37, %s38, %s39
      %p43 = pneg %p37
      %p44 = scmp.eq.s32.totalorder %s14, 1
      %p45 = por %p43, %p44
      %p46 = scmp.ne.s32.totalorder %s38, %s41
      %p47 = scmp.eq.s32.totalorder %s14, 0
      %p48 = por %p46, %p47
      %p49 = scmp.ne.s32.totalorder %s38, %s41
      %p50 = scmp.eq.s32.totalorder %s19, 1
      %p51 = por %p49, %p50
      %p52 = scmp.ne.s32.totalorder %s41, %s42
      %p53 = scmp.eq.s32.totalorder %s19, 0
      %p54 = por %p52, %p53
      %p55 = scmp.ne.s32.totalorder %s41, %s42
      %p56 = scmp.eq.s32.totalorder %s20, 1
      %p57 = por %p55, %p56
      %p59 = scmp.ne.s32.totalorder %s42, %s58
      %p60 = scmp.eq.s32.totalorder %s20, 0
      %p61 = por %p59, %p60
      %s63 = sadd.s32 %s62, 1
      %p66 = scmp.eq.s32.totalorder %s14, 1
      %p67 = scmp.ne.s32.totalorder %s62, %s64
      %p68 = scmp.eq.s32.totalorder %s14, 0
      %p69 = por %p67, %p68
      %p70 = scmp.ne.s32.totalorder %s62, %s64
      %p71 = scmp.eq.s32.totalorder %s19, 1
      %p72 = por %p70, %p71
      %p73 = scmp.ne.s32.totalorder %s64, %s65
      %p74 = scmp.eq.s32.totalorder %s19, 0
      %p75 = por %p73, %p74
      %p76 = scmp.ne.s32.totalorder %s64, %s65
      %p77 = scmp.eq.s32.totalorder %s20, 1
      %p78 = por %p76, %p77
      %p80 = scmp.ne.s32.totalorder %s65, %s79
      %p81 = scmp.eq.s32.totalorder %s20, 0
      %p82 = por %p80, %p81
      %s83 = ssub.s32 %s22, %s29
      %s84 = ssub.s32 %s21, %s33
      %s85 = sor.u32 %s83, %s84
      %p86 = scmp.eq.s32.totalorder %s85, 0
      %s88 = sadd.s32 %s87, 1
      %s89 = scalar_select %p86, %s87, %s88
      %p92 = pneg %p86
      %p93 = scmp.eq.s32.totalorder %s14, 1
      %p94 = por %p92, %p93
      %p95 = scmp.ne.s32.totalorder %s87, %s90
      %p96 = scmp.eq.s32.totalorder %s14, 0
      %p97 = por %p95, %p96
      %p98 = scmp.ne.s32.totalorder %s87, %s90
      %p99 = scmp.eq.s32.totalorder %s19, 1
      %p100 = por %p98, %p99
      %p101 = scmp.ne.s32.totalorder %s90, %s91
      %p102 = scmp.eq.s32.totalorder %s19, 0
      %p103 = por %p101, %p102
      %p104 = scmp.ne.s32.totalorder %s90, %s91
      %p105 = scmp.eq.s32.totalorder %s20, 1
      %p106 = por %p104, %p105
      %p108 = scmp.ne.s32.totalorder %s91, %s107
      %p109 = scmp.eq.s32.totalorder %s20, 0
      %p110 = por %p108, %p109
      %p111 = scmp.le.s32.totalorder 1, %s14
      %p112 = scmp.lt.s32.totalorder %s14, 3
      %p113 = pnand %p111, %p112
      %p114 = pneg %p113
      // Predicated region
      $region9: #{tpu_custom_call.1} parent=5 // pred_check
        _
      $region10: #{tpu_custom_call.1} parent=5 // pred_check_branch
        %116 = sbr.rel (%p113) target = $region12
      $region11: #{tpu_custom_call.1} parent=5 // pred_region
        %s117 = ssub.s32 %s14, 1
        // Predicated region
        $region13: #{tpu_custom_call.1} parent=11 // pred_check
          %p118 = pneg %p75
        $region14: #{tpu_custom_call.1} parent=11 // pred_check_branch
          %120 = sbr.rel (%p118) target = $region16
        $region15: #{tpu_custom_call.1} parent=11 // pred_region
          _
        $region16: #{tpu_custom_call.1} parent=11 // pred_fallthru
          _
      $region12: #{tpu_custom_call.1} parent=5 // pred_fallthru
        _
      %p121 = scmp.lt.s32.totalorder %s14, 2
      // Predicated region
      $region17: #{tpu_custom_call.1} parent=5 // pred_check
        %p122 = pneg %p121
      $region18: #{tpu_custom_call.1} parent=5 // pred_check_branch
        %124 = sbr.rel (%p122) target = $region20
      $region19: #{tpu_custom_call.1} parent=5 // pred_region
        // Predicated region
        $region21: #{tpu_custom_call.1} parent=19 // pred_check
          %p125 = pneg %p48
        $region22: #{tpu_custom_call.1} parent=19 // pred_check_branch
          %127 = sbr.rel (%p125) target = $region24
        $region23: #{tpu_custom_call.1} parent=19 // pred_region
          %s128 = sand.u32 %s38, 1
          %s129 = scalar_lea.sflag [#allocation3], %s128
          %s130 = sand.u32 %s38, 1
          %s131 = smul.addr %s130, 2
          %s132 = scalar_lea.vmem [#allocation2], %s131
          %s134 = ssub.s32 32, 32
          %135 = vsyncadd %s129, %s134
          %s136 = smul.addr %s21, 2
          %s137 = smul.addr %s22, 2
          %s138 = sadd.s32 %s136, %s137
          %s139 = smul.addr %s138, 16
          %s140 = scalar_lea.hbm %s0, %s139
          %s142 = sshll.u32 %s132, 4
          %s143 = int_to_ptr.vmem [resolvable:$true] %s142
          %145 = dma.hbm_to_vmem [thread:$0]  %s140, 32, %s143, %s129
        $region24: #{tpu_custom_call.1} parent=19 // pred_fallthru
          _
      $region20: #{tpu_custom_call.1} parent=5 // pred_fallthru
        _
      %p146 = scmp.le.s32.totalorder 1, %s14
      %p147 = scmp.lt.s32.totalorder %s14, 3
      %p148 = pnand %p146, %p147
      %p149 = pneg %p148
      // Predicated region
      $region25: #{tpu_custom_call.1} parent=5 // pred_check
        _
      $region26: #{tpu_custom_call.1} parent=5 // pred_check_branch
        %151 = sbr.rel (%p148) target = $region28
      $region27: #{tpu_custom_call.1} parent=5 // pred_region
        %s152 = ssub.s32 %s14, 1
        %s153 = sand.u32 %s41, 1
        %s154 = scalar_lea.sflag [#allocation3], %s153
        %s155 = sand.u32 %s41, 1
        %s156 = smul.addr %s155, 2
        %s157 = scalar_lea.vmem [#allocation2], %s156
        // Predicated region
        $region29: #{tpu_custom_call.1} parent=27 // pred_check
          %p158 = pneg %p54
        $region30: #{tpu_custom_call.1} parent=27 // pred_check_branch
          %160 = sbr.rel (%p158) target = $region32
        $region31: #{tpu_custom_call.1} parent=27 // pred_region
          %161 = dma.done %s154, 32
        $region32: #{tpu_custom_call.1} parent=27 // pred_fallthru
          _
        %s162 = sand.u32 %s41, 1
        %s163 = scalar_lea.sflag [#allocation3], %s162
        %s164 = sand.u32 %s41, 1
        %s165 = smul.addr %s164, 2
        %s166 = scalar_lea.vmem [#allocation2], %s165
        %p167 = pneg %p54
        %p168 = pneg %p51
        %p169 = pneg %p75
        %p170 = pneg %p72
        %p171 = pneg %p103
        %p172 = pneg %p100
        %s173 = sand.u32 %s90, 1
        %s174 = scalar_lea.sflag [#allocation4], %s173
        %s175 = sand.u32 %s90, 1
        %s176 = smul.addr %s175, 2
        %s177 = scalar_lea.vmem [#allocation5], %s176
        %v178 = vld [vmem:[%s157] sm:$0x3]
        %v179 = vmul.f32 %v178, 5.656854
        %v180 = vld [vmem:[%s1] sm:$0x3]
        %v181 = vadd.f32 %v179, %v180
        %v182 = vlaneseq
        %vm183 = vcmp.ge.s32.totalorder %v182, 0
        %vm184 = vcmp.lt.s32.totalorder %v182, 256
        %vm185 = vmand %vm183, %vm184
        %186 = vst.msk [vmem:[%s177] sm:$0x3] %vm185, %v181
        %s187 = sand.u32 %s90, 1
        %s188 = scalar_lea.sflag [#allocation4], %s187
        %s189 = sand.u32 %s90, 1
        %s190 = smul.addr %s189, 2
        %s191 = scalar_lea.vmem [#allocation5], %s190
        // Predicated region
        $region33: #{tpu_custom_call.1} parent=27 // pred_check
          %p192 = pneg %p100
        $region34: #{tpu_custom_call.1} parent=27 // pred_check_branch
          %194 = sbr.rel (%p192) target = $region36
        $region35: #{tpu_custom_call.1} parent=27 // pred_region
          %s196 = ssub.s32 32, 32
          %197 = vsyncadd %s188, %s196
          %s198 = smul.addr %s23, 2
          %s199 = smul.addr %s24, 2
          %s200 = sadd.s32 %s198, %s199
          %s201 = smul.addr %s200, 16
          %s202 = scalar_lea.hbm %s2, %s201
          %s204 = sshll.u32 %s191, 4
          %s205 = int_to_ptr.vmem [resolvable:$true] %s204
          %207 = dma.vmem_to_hbm [thread:$0]  %s205, 32, %s202, %s188
        $region36: #{tpu_custom_call.1} parent=27 // pred_fallthru
          _
      $region28: #{tpu_custom_call.1} parent=5 // pred_fallthru
        _
      %p208 = scmp.le.s32.totalorder 2, %s14
      // Predicated region
      $region37: #{tpu_custom_call.1} parent=5 // pred_check
        %p209 = pneg %p208
      $region38: #{tpu_custom_call.1} parent=5 // pred_check_branch
        %211 = sbr.rel (%p209) target = $region40
      $region39: #{tpu_custom_call.1} parent=5 // pred_region
        %s212 = ssub.s32 %s14, 2
        // Predicated region
        $region41: #{tpu_custom_call.1} parent=39 // pred_check
          %p213 = pneg %p106
        $region42: #{tpu_custom_call.1} parent=39 // pred_check_branch
          %215 = sbr.rel (%p213) target = $region44
        $region43: #{tpu_custom_call.1} parent=39 // pred_region
          %s216 = sand.u32 %s91, 1
          %s217 = scalar_lea.sflag [#allocation4], %s216
          %s218 = sand.u32 %s91, 1
          %s219 = smul.addr %s218, 2
          %s220 = scalar_lea.vmem [#allocation5], %s219
          %221 = dma.done %s217, 32
        $region44: #{tpu_custom_call.1} parent=39 // pred_fallthru
          _
      $region40: #{tpu_custom_call.1} parent=5 // pred_fallthru
        _
    $region6: #{tpu_custom_call.1} parent=1 // loop_footer
      %s18 = sadd.s32 1, %s14
    $region7: #{tpu_custom_call.1} parent=1 // loop_footer_branch
      %13 = sbr.rel target = $region3
    $region8: #{tpu_custom_call.1} parent=1 // loop_exit
      _
    %222 = vsyncpa [#allocation3], 1
    %s223 = scalar_lea.sflag [#allocation3], 1
    %224 = vsyncpa %s223, 1
    %225 = vsyncpa [#allocation4], 1
    %s226 = scalar_lea.sflag [#allocation4], 1
    %227 = vsyncpa %s226, 1

</llo_original>
